<compile_context>
chip_gen: v7x
topology: tpu7x:2x2x1
jax: 0.10.0
libtpu: 0.0.40
codegen_flags: <defaults>
</compile_context>

<pallas_src>
import functools

import jax
import jax.numpy as jnp
import numpy as np
from jax.experimental import pallas as pl
from jax.experimental.pallas import tpu as pltpu

NUM_CHANNELS = 1


def _res_conv_kernel(x_ref, halo_ref, w_ref, b_ref, out_ref, p_ref,
                     *, TH, W, Cin, Cout):
    """One (batch, row-band) grid step.

    x_ref   : (Cin, P)        channel-major NCHW-flat band, P = TH*W
    halo_ref: (2*Cin, W)      reflected rows just above / below the band
    w_ref   : (Cout, 9*Cin)   fused conv weights, K ordered (kh, kw, ci)
    b_ref   : (Cout, 1)       fused bias
    out_ref : (Cout, P)       NCHW-flat output band (lane-dense store)
    p_ref   : (9*Cin, P)      VMEM scratch: patch matrix, K on sublanes
    """
    P = TH * W
    f32 = jnp.float32

    x = x_ref[...].astype(f32)                       # (Cin, P)
    halo = halo_ref[...].astype(f32)                 # (2*Cin, W)
    top, bot = halo[:Cin, :], halo[Cin:, :]

    # --- Width (kw) taps: +-1 lane shifts; ReflectionPad fix only at the two
    # edge columns of each row (lane p = hl*W + w).
    col = jax.lax.broadcasted_iota(jnp.int32, (1, W), 1)
    while col.shape[1] < P:                          # periodic 0..W-1 pattern, no
        col = jnp.concatenate([col, col], axis=1)    # int-mod / reshape needed
    col = col[:, :P]
    left_edge, right_edge = col == 0, col == (W - 1)

    xm1 = jnp.concatenate([x[:, :1], x[:, :P - 1]], axis=1)   # x[.., w-1] (edges masked)
    xp1 = jnp.concatenate([x[:, 1:], x[:, P - 1:]], axis=1)   # x[.., w+1] (edges masked)
    vals = (jnp.where(left_edge, xp1, xm1),          # kw=0 -> x[.., reflect(w-1)]
            x,                                       # kw=1 -> x[.., w]
            jnp.where(right_edge, xm1, xp1))         # kw=2 -> x[.., reflect(w+1)]

    def shift_w(row):                                # same kw taps for one halo row
        r0 = jnp.concatenate([row[:, 1:2], row[:, :W - 1]], axis=1)
        r2 = jnp.concatenate([row[:, 1:], row[:, W - 2:W - 1]], axis=1)
        return (r0, row, r2)

    tops, bots = shift_w(top), shift_w(bot)

    # --- Height (kh) taps: whole-row (W-lane) offsets -> contiguous slab stores
    # into the (9*Cin, P) patch matrix; boundary rows come from the halos.
    for kh in range(3):
        for kw in range(3):
            r = (kh * 3 + kw) * Cin
            rows = slice(r, r + Cin)
            if kh == 0:
                p_ref[rows, 0:W] = tops[kw]
                p_ref[rows, W:P] = vals[kw][:, 0:P - W]
            elif kh == 1:
                p_ref[rows, :] = vals[kw]
            else:
                p_ref[rows, 0:P - W] = vals[kw][:, W:P]
                p_ref[rows, P - W:P] = bots[kw]

    # --- Single fused MXU contraction for both convolutions (K accumulated
    # inside the MXU; output-sized accumulator materialized once).
    acc = jnp.dot(w_ref[...], p_ref[...], preferred_element_type=f32)  # (Cout, P)
    acc = acc + b_ref[...]

    nf = Cout - NUM_CHANNELS
    # Feature channels: ReLU.
    # TODO(synk): nn.Dropout2d(p=0.05) omitted (eval-mode identity only).
    out_ref[:nf, :] = jnp.maximum(acc[:nf, :], 0.0).astype(out_ref.dtype)
    # Image channel(s): tanh/8 + residual; tanh only touches NUM_CHANNELS rows.
    resid = x[Cin - NUM_CHANNELS:, :]
    out_ref[nf:, :] = (jnp.tanh(acc[nf:, :]) * 0.125 + resid).astype(out_ref.dtype)


def _vmem_estimate(th, W, Cin, Cout, itemsize):
    """Rough per-grid-step VMEM footprint (double-buffered I/O, scratch, temps)."""
    P = th * W
    per_lane = (2 * Cin            # x band block (double-buffered)
                + 2 * Cout         # out block (double-buffered)
                + (9 * Cin + 8)    # patch-matrix scratch (sublane padded)
                + 6 * Cin          # shifted-variant temporaries
                + 2 * Cout)        # matmul result / epilogue temporaries
    fixed = (Cout * (9 * Cin + 1) + 4 * Cin * W) * itemsize
    return per_lane * P * itemsize + fixed


def _pick_band_rows(H, W, Cin, Cout, itemsize, budget_bytes=30 << 20):
    """Largest band height TH dividing H with TH*W a lane multiple (or TH == H)
    whose footprint fits the budget; falls back to the smallest legal band."""
    cands = [th for th in range(1, H + 1)
             if H % th == 0 and ((th * W) % 128 == 0 or th == H)]
    fitting = [th for th in cands
               if _vmem_estimate(th, W, Cin, Cout, itemsize) <= budget_bytes]
    return max(fitting) if fitting else min(cands)


def res_conv_layer(x_nchw, w_feat, b_feat, w_img, b_img, *, band_rows=None):
    """ResConvLayer.forward (eval). x_nchw: (N, Cin, H, W) -> (N, 32, H, W)."""
    N, Cin, H, W = x_nchw.shape
    assert H >= 2 and W >= 2, "ReflectionPad2d(1) requires H, W >= 2"
    Cout = w_feat.shape[0] + w_img.shape[0]
    itemsize = x_nchw.dtype.itemsize

    if band_rows is None:
        TH = _pick_band_rows(H, W, Cin, Cout, itemsize)
    else:
        assert H % band_rows == 0 and ((band_rows * W) % 128 == 0 or band_rows == H)
        TH = band_rows
    NB = H // TH
    P = TH * W

    # Free NCHW-flat view of the activations (channel-major, lane-dense).
    x_flat = x_nchw.reshape(N, Cin, H * W)

    # Per-band halo rows (with reflection at the image boundary) gathered once
    # in the wrapper so every in-kernel access is a contiguous lane slab.
    starts = np.arange(NB) * TH
    top_rows = np.abs(starts - 1)                              # reflect(-1) -> 1
    bot_rows = starts + TH
    bot_rows = np.minimum(bot_rows, 2 * (H - 1) - bot_rows)    # reflect(H) -> H-2
    halo_rows = np.stack([top_rows, bot_rows], axis=1).reshape(-1)       # (2*NB,)
    halos = jnp.transpose(x_nchw[:, :, halo_rows, :], (0, 2, 1, 3))      # (N, 2NB, Cin, W)
    halos = halos.reshape(N, NB, 2 * Cin, W)

    # Fuse both convs' params: OIHW -> (Cout, kh, kw, ci) -> (Cout, 9*Cin).
    w = jnp.concatenate([w_feat, w_img], axis=0)
    w = jnp.transpose(w, (0, 2, 3, 1)).reshape(Cout, 9 * Cin).astype(jnp.float32)
    b = jnp.concatenate([b_feat, b_img], axis=0).reshape(Cout, 1).astype(jnp.float32)

    kernel = functools.partial(_res_conv_kernel, TH=TH, W=W, Cin=Cin, Cout=Cout)
    vmem_limit = int(min(max(2 * _vmem_estimate(TH, W, Cin, Cout, itemsize),
                             32 << 20), 64 << 20))

    out_flat = pl.pallas_call(
        kernel,
        out_shape=jax.ShapeDtypeStruct((N, Cout, H * W), x_nchw.dtype),
        grid=(N, NB),
        in_specs=[
            pl.BlockSpec((None, Cin, P), lambda n, j: (n, 0, j)),
            pl.BlockSpec((None, None, 2 * Cin, W), lambda n, j: (n, j, 0, 0)),
            pl.BlockSpec((Cout, 9 * Cin), lambda n, j: (0, 0)),
            pl.BlockSpec((Cout, 1), lambda n, j: (0, 0)),
        ],
        out_specs=pl.BlockSpec((None, Cout, P), lambda n, j: (n, 0, j)),
        scratch_shapes=[pltpu.VMEM((9 * Cin, P), jnp.float32)],
        compiler_params=pltpu.CompilerParams(
            dimension_semantics=("parallel", "parallel"),
            vmem_limit_bytes=vmem_limit),
    )(x_flat, halos, w, b)

    # Contiguous (free) reshape back to NCHW -- no transpose of the output.
    return out_flat.reshape(N, Cout, H, W)


def _reference(x_nchw, w_feat, b_feat, w_img, b_img):
    """Pure-JAX reference mirroring the PyTorch forward (eval mode)."""
    img_in = x_nchw[:, -NUM_CHANNELS:, :, :]
    xpad = jnp.pad(x_nchw, ((0, 0), (0, 0), (1, 1), (1, 1)), mode="reflect")

    def conv(x, w, b):
        y = jax.lax.conv_general_dilated(
            x, w, window_strides=(1, 1), padding="VALID",
            dimension_numbers=("NCHW", "OIHW", "NCHW"))
        return y + b[None, :, None, None]

    image_out = jnp.tanh(conv(xpad, w_img, b_img)) / 8.0 + img_in
    features_out = jnp.maximum(conv(xpad, w_feat, b_feat), 0.0)
    return jnp.concatenate([features_out, image_out], axis=1)


if __name__ == "__main__":
    key = jax.random.PRNGKey(0)
    N, Cin, H, W = 2, 4, 16, 16
    out_filters = 32

    k1, k2, k3, k4, k5 = jax.random.split(key, 5)
    x = jax.random.normal(k1, (N, Cin, H, W), dtype=jnp.float32)
    # Deterministic synthetic params (PyTorch Conv2d shapes: OIHW + bias).
    scale = 1.0 / np.sqrt(Cin * 9.0)
    w_feat = jax.random.uniform(k2, (out_filters - NUM_CHANNELS, Cin, 3, 3),
                                jnp.float32, -scale, scale)
    b_feat = jax.random.uniform(k3, (out_filters - NUM_CHANNELS,),
                                jnp.float32, -scale, scale)
    w_img = jax.random.uniform(k4, (NUM_CHANNELS, Cin, 3, 3),
                               jnp.float32, -scale, scale)
    b_img = jax.random.uniform(k5, (NUM_CHANNELS,), jnp.float32, -scale, scale)

    ref = _reference(x, w_feat, b_feat, w_img, b_img)

    # Whole-image band (auto tiling).
    out = jax.jit(res_conv_layer)(x, w_feat, b_feat, w_img, b_img)
    out = jax.block_until_ready(out)
    assert out.shape == (N, out_filters, H, W), out.shape
    np.testing.assert_allclose(np.asarray(out), np.asarray(ref),
                               atol=1e-3, rtol=1e-3)

    # Multi-band path (2 row bands of 8 rows) -- exercises the halo handling.
    banded_fn = jax.jit(functools.partial(res_conv_layer, band_rows=8))
    banded = jax.block_until_ready(banded_fn(x, w_feat, b_feat, w_img, b_img))
    np.testing.assert_allclose(np.asarray(banded), np.asarray(ref),
                               atol=1e-3, rtol=1e-3)

    print("KERNEL_OK")
</pallas_src>

<mosaic_0001>
module attributes {stable_mosaic.version = 11 : i64} {
  func.func @_res_conv_kernel(%arg0: i32, %arg1: i32, %arg2: memref<1x4x256xf32, #tpu.memory_space<vmem>>, %arg3: memref<1x1x8x16xf32, #tpu.memory_space<vmem>>, %arg4: memref<32x36xf32, #tpu.memory_space<vmem>>, %arg5: memref<32x1xf32, #tpu.memory_space<vmem>>, %arg6: memref<1x32x256xf32, #tpu.memory_space<vmem>>, %arg7: memref<36x256xf32, #tpu.memory_space<vmem>>) attributes {dimension_semantics = [#tpu.dimension_semantics<parallel>, #tpu.dimension_semantics<parallel>], iteration_bounds = array<i64: 2, 1>, scalar_prefetch = 0 : i64, scratch_operands = 1 : i64, tpu.core_type = #tpu.core_type<tc>, window_params = [{transform_indices = @transform_0, window_bounds = array<i64: 1, 4, 256>}, {transform_indices = @transform_1, window_bounds = array<i64: 1, 1, 8, 16>}, {pipeline_mode = #tpu.pipeline_mode<synchronous>, transform_indices = @transform_2, window_bounds = array<i64: 32, 36>}, {pipeline_mode = #tpu.pipeline_mode<synchronous>, transform_indices = @transform_3, window_bounds = array<i64: 32, 1>}, {transform_indices = @transform_4, window_bounds = array<i64: 1, 32, 256>}]} {
    %c0 = arith.constant 0 : index
    %c0_0 = arith.constant 0 : index
    %c0_1 = arith.constant 0 : index
    %0 = vector.load %arg2[%c0, %c0_0, %c0_1] : memref<1x4x256xf32, #tpu.memory_space<vmem>>, vector<1x4x256xf32>
    %1 = vector.shape_cast %0 : vector<1x4x256xf32> to vector<4x256xf32>
    %c0_2 = arith.constant 0 : index
    %c0_3 = arith.constant 0 : index
    %c0_4 = arith.constant 0 : index
    %c0_5 = arith.constant 0 : index
    %2 = vector.load %arg3[%c0_2, %c0_3, %c0_4, %c0_5] : memref<1x1x8x16xf32, #tpu.memory_space<vmem>>, vector<1x1x8x16xf32>
    %3 = vector.shape_cast %2 : vector<1x1x8x16xf32> to vector<8x16xf32>
    %4 = vector.extract_strided_slice %3 {offsets = [0, 0], sizes = [4, 16], strides = [1, 1]} : vector<8x16xf32> to vector<4x16xf32>
    %5 = vector.extract_strided_slice %3 {offsets = [4, 0], sizes = [4, 16], strides = [1, 1]} : vector<8x16xf32> to vector<4x16xf32>
    %6 = tpu.iota {dimensions = array<i32: 1>} : vector<1x16xi32>
    %7 = tpu.concatenate %6, %6 in 1 : vector<1x16xi32>, vector<1x16xi32> -> vector<1x32xi32>
    %8 = tpu.concatenate %7, %7 in 1 : vector<1x32xi32>, vector<1x32xi32> -> vector<1x64xi32>
    %9 = tpu.concatenate %8, %8 in 1 : vector<1x64xi32>, vector<1x64xi32> -> vector<1x128xi32>
    %10 = tpu.concatenate %9, %9 in 1 : vector<1x128xi32>, vector<1x128xi32> -> vector<1x256xi32>
    %c0_i32 = arith.constant 0 : i32
    %11 = vector.broadcast %c0_i32 : i32 to vector<1x256xi32>
    %12 = arith.cmpi eq, %10, %11 : vector<1x256xi32>
    %c15_i32 = arith.constant 15 : i32
    %13 = vector.broadcast %c15_i32 : i32 to vector<1x256xi32>
    %14 = arith.cmpi eq, %10, %13 : vector<1x256xi32>
    %15 = vector.extract_strided_slice %1 {offsets = [0, 0], sizes = [4, 1], strides = [1, 1]} : vector<4x256xf32> to vector<4x1xf32>
    %16 = vector.extract_strided_slice %1 {offsets = [0, 0], sizes = [4, 255], strides = [1, 1]} : vector<4x256xf32> to vector<4x255xf32>
    %17 = tpu.concatenate %15, %16 in 1 : vector<4x1xf32>, vector<4x255xf32> -> vector<4x256xf32>
    %18 = vector.extract_strided_slice %1 {offsets = [0, 1], sizes = [4, 255], strides = [1, 1]} : vector<4x256xf32> to vector<4x255xf32>
    %19 = vector.extract_strided_slice %1 {offsets = [0, 255], sizes = [4, 1], strides = [1, 1]} : vector<4x256xf32> to vector<4x1xf32>
    %20 = tpu.concatenate %18, %19 in 1 : vector<4x255xf32>, vector<4x1xf32> -> vector<4x256xf32>
    %21 = vector.shape_cast %12 : vector<1x256xi1> to vector<1x256xi1>
    %22 = vector.broadcast %21 : vector<1x256xi1> to vector<4x256xi1>
    %23 = arith.select %22, %20, %17 : vector<4x256xi1>, vector<4x256xf32>
    %24 = vector.shape_cast %14 : vector<1x256xi1> to vector<1x256xi1>
    %25 = vector.broadcast %24 : vector<1x256xi1> to vector<4x256xi1>
    %26 = arith.select %25, %17, %20 : vector<4x256xi1>, vector<4x256xf32>
    %27 = vector.extract_strided_slice %4 {offsets = [0, 1], sizes = [4, 1], strides = [1, 1]} : vector<4x16xf32> to vector<4x1xf32>
    %28 = vector.extract_strided_slice %4 {offsets = [0, 0], sizes = [4, 15], strides = [1, 1]} : vector<4x16xf32> to vector<4x15xf32>
    %29 = tpu.concatenate %27, %28 in 1 : vector<4x1xf32>, vector<4x15xf32> -> vector<4x16xf32>
    %30 = vector.extract_strided_slice %4 {offsets = [0, 1], sizes = [4, 15], strides = [1, 1]} : vector<4x16xf32> to vector<4x15xf32>
    %31 = vector.extract_strided_slice %4 {offsets = [0, 14], sizes = [4, 1], strides = [1, 1]} : vector<4x16xf32> to vector<4x1xf32>
    %32 = tpu.concatenate %30, %31 in 1 : vector<4x15xf32>, vector<4x1xf32> -> vector<4x16xf32>
    %33 = vector.extract_strided_slice %5 {offsets = [0, 1], sizes = [4, 1], strides = [1, 1]} : vector<4x16xf32> to vector<4x1xf32>
    %34 = vector.extract_strided_slice %5 {offsets = [0, 0], sizes = [4, 15], strides = [1, 1]} : vector<4x16xf32> to vector<4x15xf32>
    %35 = tpu.concatenate %33, %34 in 1 : vector<4x1xf32>, vector<4x15xf32> -> vector<4x16xf32>
    %36 = vector.extract_strided_slice %5 {offsets = [0, 1], sizes = [4, 15], strides = [1, 1]} : vector<4x16xf32> to vector<4x15xf32>
    %37 = vector.extract_strided_slice %5 {offsets = [0, 14], sizes = [4, 1], strides = [1, 1]} : vector<4x16xf32> to vector<4x1xf32>
    %38 = tpu.concatenate %36, %37 in 1 : vector<4x15xf32>, vector<4x1xf32> -> vector<4x16xf32>
    %c0_6 = arith.constant 0 : index
    %c0_7 = arith.constant 0 : index
    %39 = vector.load %arg7[%c0_6, %c0_7] : memref<36x256xf32, #tpu.memory_space<vmem>>, vector<4x16xf32>
    tpu.vector_store %arg7[%c0_6, %c0_7], %29 {strides = array<i32>} : memref<36x256xf32, #tpu.memory_space<vmem>>, vector<4x16xf32>,
    %40 = vector.extract_strided_slice %23 {offsets = [0, 0], sizes = [4, 240], strides = [1, 1]} : vector<4x256xf32> to vector<4x240xf32>
    %c0_8 = arith.constant 0 : index
    %c16 = arith.constant 16 : index
    %41 = vector.load %arg7[%c0_8, %c16] : memref<36x256xf32, #tpu.memory_space<vmem>>, vector<4x240xf32>
    tpu.vector_store %arg7[%c0_8, %c16], %40 {strides = array<i32>} : memref<36x256xf32, #tpu.memory_space<vmem>>, vector<4x240xf32>,
    %c4 = arith.constant 4 : index
    %c0_9 = arith.constant 0 : index
    %42 = vector.load %arg7[%c4, %c0_9] : memref<36x256xf32, #tpu.memory_space<vmem>>, vector<4x16xf32>
    tpu.vector_store %arg7[%c4, %c0_9], %4 {strides = array<i32>} : memref<36x256xf32, #tpu.memory_space<vmem>>, vector<4x16xf32>,
    %43 = vector.extract_strided_slice %1 {offsets = [0, 0], sizes = [4, 240], strides = [1, 1]} : vector<4x256xf32> to vector<4x240xf32>
    %c4_10 = arith.constant 4 : index
    %c16_11 = arith.constant 16 : index
    %44 = vector.load %arg7[%c4_10, %c16_11] : memref<36x256xf32, #tpu.memory_space<vmem>>, vector<4x240xf32>
    tpu.vector_store %arg7[%c4_10, %c16_11], %43 {strides = array<i32>} : memref<36x256xf32, #tpu.memory_space<vmem>>, vector<4x240xf32>,
    %c8 = arith.constant 8 : index
    %c0_12 = arith.constant 0 : index
    %45 = vector.load %arg7[%c8, %c0_12] : memref<36x256xf32, #tpu.memory_space<vmem>>, vector<4x16xf32>
    tpu.vector_store %arg7[%c8, %c0_12], %32 {strides = array<i32>} : memref<36x256xf32, #tpu.memory_space<vmem>>, vector<4x16xf32>,
    %46 = vector.extract_strided_slice %26 {offsets = [0, 0], sizes = [4, 240], strides = [1, 1]} : vector<4x256xf32> to vector<4x240xf32>
    %c8_13 = arith.constant 8 : index
    %c16_14 = arith.constant 16 : index
    %47 = vector.load %arg7[%c8_13, %c16_14] : memref<36x256xf32, #tpu.memory_space<vmem>>, vector<4x240xf32>
    tpu.vector_store %arg7[%c8_13, %c16_14], %46 {strides = array<i32>} : memref<36x256xf32, #tpu.memory_space<vmem>>, vector<4x240xf32>,
    %c12 = arith.constant 12 : index
    %c0_15 = arith.constant 0 : index
    %48 = vector.load %arg7[%c12, %c0_15] : memref<36x256xf32, #tpu.memory_space<vmem>>, vector<4x256xf32>
    tpu.vector_store %arg7[%c12, %c0_15], %23 {strides = array<i32>} : memref<36x256xf32, #tpu.memory_space<vmem>>, vector<4x256xf32>,
    %c16_16 = arith.constant 16 : index
    %c0_17 = arith.constant 0 : index
    %49 = vector.load %arg7[%c16_16, %c0_17] : memref<36x256xf32, #tpu.memory_space<vmem>>, vector<4x256xf32>
    tpu.vector_store %arg7[%c16_16, %c0_17], %1 {strides = array<i32>} : memref<36x256xf32, #tpu.memory_space<vmem>>, vector<4x256xf32>,
    %c20 = arith.constant 20 : index
    %c0_18 = arith.constant 0 : index
    %50 = vector.load %arg7[%c20, %c0_18] : memref<36x256xf32, #tpu.memory_space<vmem>>, vector<4x256xf32>
    tpu.vector_store %arg7[%c20, %c0_18], %26 {strides = array<i32>} : memref<36x256xf32, #tpu.memory_space<vmem>>, vector<4x256xf32>,
    %51 = vector.extract_strided_slice %23 {offsets = [0, 16], sizes = [4, 240], strides = [1, 1]} : vector<4x256xf32> to vector<4x240xf32>
    %c24 = arith.constant 24 : index
    %c0_19 = arith.constant 0 : index
    %52 = vector.load %arg7[%c24, %c0_19] : memref<36x256xf32, #tpu.memory_space<vmem>>, vector<4x240xf32>
    tpu.vector_store %arg7[%c24, %c0_19], %51 {strides = array<i32>} : memref<36x256xf32, #tpu.memory_space<vmem>>, vector<4x240xf32>,
    %c24_20 = arith.constant 24 : index
    %c240 = arith.constant 240 : index
    %53 = vector.load %arg7[%c24_20, %c240] : memref<36x256xf32, #tpu.memory_space<vmem>>, vector<4x16xf32>
    tpu.vector_store %arg7[%c24_20, %c240], %35 {strides = array<i32>} : memref<36x256xf32, #tpu.memory_space<vmem>>, vector<4x16xf32>,
    %54 = vector.extract_strided_slice %1 {offsets = [0, 16], sizes = [4, 240], strides = [1, 1]} : vector<4x256xf32> to vector<4x240xf32>
    %c28 = arith.constant 28 : index
    %c0_21 = arith.constant 0 : index
    %55 = vector.load %arg7[%c28, %c0_21] : memref<36x256xf32, #tpu.memory_space<vmem>>, vector<4x240xf32>
    tpu.vector_store %arg7[%c28, %c0_21], %54 {strides = array<i32>} : memref<36x256xf32, #tpu.memory_space<vmem>>, vector<4x240xf32>,
    %c28_22 = arith.constant 28 : index
    %c240_23 = arith.constant 240 : index
    %56 = vector.load %arg7[%c28_22, %c240_23] : memref<36x256xf32, #tpu.memory_space<vmem>>, vector<4x16xf32>
    tpu.vector_store %arg7[%c28_22, %c240_23], %5 {strides = array<i32>} : memref<36x256xf32, #tpu.memory_space<vmem>>, vector<4x16xf32>,
    %57 = vector.extract_strided_slice %26 {offsets = [0, 16], sizes = [4, 240], strides = [1, 1]} : vector<4x256xf32> to vector<4x240xf32>
    %c32 = arith.constant 32 : index
    %c0_24 = arith.constant 0 : index
    %58 = vector.load %arg7[%c32, %c0_24] : memref<36x256xf32, #tpu.memory_space<vmem>>, vector<4x240xf32>
    tpu.vector_store %arg7[%c32, %c0_24], %57 {strides = array<i32>} : memref<36x256xf32, #tpu.memory_space<vmem>>, vector<4x240xf32>,
    %c32_25 = arith.constant 32 : index
    %c240_26 = arith.constant 240 : index
    %59 = vector.load %arg7[%c32_25, %c240_26] : memref<36x256xf32, #tpu.memory_space<vmem>>, vector<4x16xf32>
    tpu.vector_store %arg7[%c32_25, %c240_26], %38 {strides = array<i32>} : memref<36x256xf32, #tpu.memory_space<vmem>>, vector<4x16xf32>,
    %c0_27 = arith.constant 0 : index
    %c0_28 = arith.constant 0 : index
    %60 = vector.load %arg4[%c0_27, %c0_28] : memref<32x36xf32, #tpu.memory_space<vmem>>, vector<32x36xf32>
    %c0_29 = arith.constant 0 : index
    %c0_30 = arith.constant 0 : index
    %61 = vector.load %arg7[%c0_29, %c0_30] : memref<36x256xf32, #tpu.memory_space<vmem>>, vector<36x256xf32>
    %cst = arith.constant dense<0.000000e+00> : vector<32x256xf32>
    %62 = tpu.matmul %60, %61, %cst {dimension_numbers = #tpu.dot_dimension_numbers<[1], [0], [0], [1], [0, 0, 1, 1], [], []>} : vector<32x36xf32>, vector<36x256xf32>, vector<32x256xf32> -> vector<32x256xf32>
    %c0_31 = arith.constant 0 : index
    %c0_32 = arith.constant 0 : index
    %63 = vector.load %arg5[%c0_31, %c0_32] : memref<32x1xf32, #tpu.memory_space<vmem>>, vector<32x1xf32>
    %64 = vector.broadcast %63 : vector<32x1xf32> to vector<32x256xf32>
    %65 = arith.addf %62, %64 : vector<32x256xf32>
    %66 = vector.extract_strided_slice %65 {offsets = [0, 0], sizes = [31, 256], strides = [1, 1]} : vector<32x256xf32> to vector<31x256xf32>
    %cst_33 = arith.constant 0.000000e+00 : f32
    %67 = vector.broadcast %cst_33 : f32 to vector<31x256xf32>
    %68 = arith.maximumf %66, %67 : vector<31x256xf32>
    %c0_34 = arith.constant 0 : index
    %c0_35 = arith.constant 0 : index
    %c0_36 = arith.constant 0 : index
    %69 = vector.load %arg6[%c0_34, %c0_35, %c0_36] : memref<1x32x256xf32, #tpu.memory_space<vmem>>, vector<1x31x256xf32>
    %70 = vector.shape_cast %69 : vector<1x31x256xf32> to vector<31x256xf32>
    %71 = vector.shape_cast %68 : vector<31x256xf32> to vector<1x31x256xf32>
    tpu.vector_store %arg6[%c0_34, %c0_35, %c0_36], %71 {strides = array<i32>} : memref<1x32x256xf32, #tpu.memory_space<vmem>>, vector<1x31x256xf32>,
    %72 = vector.extract_strided_slice %1 {offsets = [3, 0], sizes = [1, 256], strides = [1, 1]} : vector<4x256xf32> to vector<1x256xf32>
    %73 = vector.extract_strided_slice %65 {offsets = [31, 0], sizes = [1, 256], strides = [1, 1]} : vector<32x256xf32> to vector<1x256xf32>
    %74 = math.tanh %73 : vector<1x256xf32>
    %cst_37 = arith.constant 1.250000e-01 : f32
    %75 = vector.broadcast %cst_37 : f32 to vector<1x256xf32>
    %76 = arith.mulf %74, %75 : vector<1x256xf32>
    %77 = arith.addf %76, %72 : vector<1x256xf32>
    %c0_38 = arith.constant 0 : index
    %c31 = arith.constant 31 : index
    %c0_39 = arith.constant 0 : index
    %78 = vector.load %arg6[%c0_38, %c31, %c0_39] : memref<1x32x256xf32, #tpu.memory_space<vmem>>, vector<1x1x256xf32>
    %79 = vector.shape_cast %78 : vector<1x1x256xf32> to vector<1x256xf32>
    %80 = vector.shape_cast %77 : vector<1x256xf32> to vector<1x1x256xf32>
    tpu.vector_store %arg6[%c0_38, %c31, %c0_39], %80 {strides = array<i32>} : memref<1x32x256xf32, #tpu.memory_space<vmem>>, vector<1x1x256xf32>,
    return
  }
  func.func @transform_0(%arg0: i32, %arg1: i32) -> (i32, i32, i32) {
    %c0_i32 = arith.constant 0 : i32
    %c0_i32_0 = arith.constant 0 : i32
    return %arg0, %c0_i32, %arg1 : i32, i32, i32
  }
  func.func @transform_1(%arg0: i32, %arg1: i32) -> (i32, i32, i32, i32) {
    %c0_i32 = arith.constant 0 : i32
    %c0_i32_0 = arith.constant 0 : i32
    %c0_i32_1 = arith.constant 0 : i32
    return %arg0, %arg1, %c0_i32, %c0_i32_0 : i32, i32, i32, i32
  }
  func.func @transform_2(%arg0: i32, %arg1: i32) -> (i32, i32) {
    %c0_i32 = arith.constant 0 : i32
    %c0_i32_0 = arith.constant 0 : i32
    %c0_i32_1 = arith.constant 0 : i32
    return %c0_i32, %c0_i32_0 : i32, i32
  }
  func.func @transform_3(%arg0: i32, %arg1: i32) -> (i32, i32) {
    %c0_i32 = arith.constant 0 : i32
    %c0_i32_0 = arith.constant 0 : i32
    %c0_i32_1 = arith.constant 0 : i32
    return %c0_i32, %c0_i32_0 : i32, i32
  }
  func.func @transform_4(%arg0: i32, %arg1: i32) -> (i32, i32, i32) {
    %c0_i32 = arith.constant 0 : i32
    %c0_i32_0 = arith.constant 0 : i32
    return %arg0, %c0_i32, %arg1 : i32, i32, i32
  }
}

</mosaic_0001>

<llo_original>
// kernel: res_conv_layer.1
$region0: #{res_conv_layer.1}
  #allocation0 [shape = 'u32[]', space=smem, size = 0x4, offset = 0x4, fixed_abs, tag = 'smem constant byte address 0x4 - core index']
  #allocation1 [shape = 'u32[144,128]{1,0:T(1,128)}', space=vmem, size = 0x12000, scoped, tag = 'internal scratch']
  #allocation2 [shape = 'f32[36,256]{1,0:T(8,128)}', space=vmem, size = 0xa000, scoped, tag = 'scratch operand']
  %s0 = inlined_call_operand.vmem [shape: f32[2,4,256], index: 0, kind: input, shape index: {}]
  %s1 = inlined_call_operand.vmem [shape: f32[2,1,8,16], index: 1, kind: input, shape index: {}]
  %s2 = inlined_call_operand.vmem [shape: f32[32,36], index: 2, kind: input, shape index: {}]
  %s3 = inlined_call_operand.vmem [shape: f32[32,1], index: 3, kind: input, shape index: {}]
  %s4 = inlined_call_operand.vmem [shape: f32[2,32,256], index: 4, kind: output, shape index: {}]
  %s5 = sld [smem:[#allocation0]]
  $region49: #{res_conv_layer.1} parent=0
    _
  %s7 = ssub.s32 1, %s5
  %s8 = scalar_select 0, %s7, %s5
  loop: start=0, step=1, limit=4
  $region2: #{res_conv_layer.1} parent=0 // loop_pre_header
    _
  $region3: #{res_conv_layer.1} parent=0 // loop_header
    %s10 = sphi 0, %s14
    %p11 = scmp.ge.s32.totalorder %s10, 4
    %s17 = sphi 0, %s29
    %s18 = sphi 0, %s25
    %s19 = sphi 0, %s17
    %s20 = sphi 0, %s18
    %s21 = sphi 0, %s19
    %s22 = sphi 0, %s20
    %s34 = sphi 0, %s36
    %s37 = sphi 0, %s34
    %s38 = sphi 0, %s37
    %s54 = sphi 0, %s38
    %s62 = sphi 0, %s64
    %s65 = sphi 0, %s62
    %s66 = sphi 0, %s65
    %s82 = sphi 0, %s66
    %s86 = sphi 0, %s86
    %s88 = sphi 0, %s86
    %s89 = sphi 0, %s88
    %s103 = sphi 0, %s89
    %s107 = sphi 0, %s107
    %s109 = sphi 0, %s107
    %s110 = sphi 0, %s109
    %s124 = sphi 0, %s110
    %s132 = sphi 0, %s134
    %s135 = sphi 0, %s132
    %s136 = sphi 0, %s135
    %s152 = sphi 0, %s136
  $region4: #{res_conv_layer.1} parent=0 // loop_header_branch
    %13 = sbr.rel (%p11) target = $region8
  $region5: #{res_conv_layer.1} parent=0 // loop_body
    %s15 = ssub.s32 %s10, 1
    %s16 = ssub.s32 %s10, 2
    %s23 = sadd.s32 1, %s18
    %p24 = scmp.ge.s32.totalorder %s23, 1
    %s25 = scalar_select %p24, 0, %s23
    %s26 = sadd.s32 1, %s17
    %s27 = scalar_select %p24, %s26, %s17
    %p28 = scmp.ge.s32.totalorder %s27, 2
    %s29 = scalar_select %p28, 0, %s27
    %s30 = ssub.s32 %s17, %s29
    %s31 = ssub.s32 %s18, %s25
    %s32 = sor.u32 %s30, %s31
    %p33 = scmp.eq.s32.totalorder %s32, 0
    %s35 = sadd.s32 %s34, 1
    %s36 = scalar_select %p33, %s34, %s35
    %p39 = pneg %p33
    %p40 = scmp.eq.s32.totalorder %s10, 1
    %p41 = por %p39, %p40
    %p42 = scmp.ne.s32.totalorder %s34, %s37
    %p43 = scmp.eq.s32.totalorder %s10, 0
    %p44 = por %p42, %p43
    %p45 = scmp.ne.s32.totalorder %s34, %s37
    %p46 = scmp.eq.s32.totalorder %s15, 1
    %p47 = por %p45, %p46
    %p48 = scmp.ne.s32.totalorder %s37, %s38
    %p49 = scmp.eq.s32.totalorder %s15, 0
    %p50 = por %p48, %p49
    %p51 = scmp.ne.s32.totalorder %s37, %s38
    %p52 = scmp.eq.s32.totalorder %s16, 1
    %p53 = por %p51, %p52
    %p55 = scmp.ne.s32.totalorder %s38, %s54
    %p56 = scmp.eq.s32.totalorder %s16, 0
    %p57 = por %p55, %p56
    %s58 = ssub.s32 %s17, %s29
    %s59 = ssub.s32 %s18, %s25
    %s60 = sor.u32 %s58, %s59
    %p61 = scmp.eq.s32.totalorder %s60, 0
    %s63 = sadd.s32 %s62, 1
    %s64 = scalar_select %p61, %s62, %s63
    %p67 = pneg %p61
    %p68 = scmp.eq.s32.totalorder %s10, 1
    %p69 = por %p67, %p68
    %p70 = scmp.ne.s32.totalorder %s62, %s65
    %p71 = scmp.eq.s32.totalorder %s10, 0
    %p72 = por %p70, %p71
    %p73 = scmp.ne.s32.totalorder %s62, %s65
    %p74 = scmp.eq.s32.totalorder %s15, 1
    %p75 = por %p73, %p74
    %p76 = scmp.ne.s32.totalorder %s65, %s66
    %p77 = scmp.eq.s32.totalorder %s15, 0
    %p78 = por %p76, %p77
    %p79 = scmp.ne.s32.totalorder %s65, %s66
    %p80 = scmp.eq.s32.totalorder %s16, 1
    %p81 = por %p79, %p80
    %p83 = scmp.ne.s32.totalorder %s66, %s82
    %p84 = scmp.eq.s32.totalorder %s16, 0
    %p85 = por %p83, %p84
    %s87 = sadd.s32 %s86, 1
    %p90 = scmp.eq.s32.totalorder %s10, 1
    %p91 = scmp.ne.s32.totalorder %s86, %s88
    %p92 = scmp.eq.s32.totalorder %s10, 0
    %p93 = por %p91, %p92
    %p94 = scmp.ne.s32.totalorder %s86, %s88
    %p95 = scmp.eq.s32.totalorder %s15, 1
    %p96 = por %p94, %p95
    %p97 = scmp.ne.s32.totalorder %s88, %s89
    %p98 = scmp.eq.s32.totalorder %s15, 0
    %p99 = por %p97, %p98
    %p100 = scmp.ne.s32.totalorder %s88, %s89
    %p101 = scmp.eq.s32.totalorder %s16, 1
    %p102 = por %p100, %p101
    %p104 = scmp.ne.s32.totalorder %s89, %s103
    %p105 = scmp.eq.s32.totalorder %s16, 0
    %p106 = por %p104, %p105
    %s108 = sadd.s32 %s107, 1
    %p111 = scmp.eq.s32.totalorder %s10, 1
    %p112 = scmp.ne.s32.totalorder %s107, %s109
    %p113 = scmp.eq.s32.totalorder %s10, 0
    %p114 = por %p112, %p113
    %p115 = scmp.ne.s32.totalorder %s107, %s109
    %p116 = scmp.eq.s32.totalorder %s15, 1
    %p117 = por %p115, %p116
    %p118 = scmp.ne.s32.totalorder %s109, %s110
    %p119 = scmp.eq.s32.totalorder %s15, 0
    %p120 = por %p118, %p119
    %p121 = scmp.ne.s32.totalorder %s109, %s110
    %p122 = scmp.eq.s32.totalorder %s16, 1
    %p123 = por %p121, %p122
    %p125 = scmp.ne.s32.totalorder %s110, %s124
    %p126 = scmp.eq.s32.totalorder %s16, 0
    %p127 = por %p125, %p126
    %s128 = ssub.s32 %s17, %s29
    %s129 = ssub.s32 %s18, %s25
    %s130 = sor.u32 %s128, %s129
    %p131 = scmp.eq.s32.totalorder %s130, 0
    %s133 = sadd.s32 %s132, 1
    %s134 = scalar_select %p131, %s132, %s133
    %p137 = pneg %p131
    %p138 = scmp.eq.s32.totalorder %s10, 1
    %p139 = por %p137, %p138
    %p140 = scmp.ne.s32.totalorder %s132, %s135
    %p141 = scmp.eq.s32.totalorder %s10, 0
    %p142 = por %p140, %p141
    %p143 = scmp.ne.s32.totalorder %s132, %s135
    %p144 = scmp.eq.s32.totalorder %s15, 1
    %p145 = por %p143, %p144
    %p146 = scmp.ne.s32.totalorder %s135, %s136
    %p147 = scmp.eq.s32.totalorder %s15, 0
    %p148 = por %p146, %p147
    %p149 = scmp.ne.s32.totalorder %s135, %s136
    %p150 = scmp.eq.s32.totalorder %s16, 1
    %p151 = por %p149, %p150
    %p153 = scmp.ne.s32.totalorder %s136, %s152
    %p154 = scmp.eq.s32.totalorder %s16, 0
    %p155 = por %p153, %p154
    %p156 = scmp.le.s32.totalorder 1, %s10
    %p157 = scmp.lt.s32.totalorder %s10, 3
    %p158 = pnand %p156, %p157
    %p159 = pneg %p158
    // Predicated region
    $region9: #{res_conv_layer.1} parent=5 // pred_check
      _
    $region10: #{res_conv_layer.1} parent=5 // pred_check_branch
      %161 = sbr.rel (%p158) target = $region12
    $region11: #{res_conv_layer.1} parent=5 // pred_region
      %s162 = ssub.s32 %s10, 1
      // Predicated region
      $region13: #{res_conv_layer.1} parent=11 // pred_check
        %p163 = pneg %p99
      $region14: #{res_conv_layer.1} parent=11 // pred_check_branch
        %165 = sbr.rel (%p163) target = $region16
      $region15: #{res_conv_layer.1} parent=11 // pred_region
        _
      $region16: #{res_conv_layer.1} parent=11 // pred_fallthru
        _
      // Predicated region
      $region17: #{res_conv_layer.1} parent=11 // pred_check
        %p166 = pneg %p120
      $region18: #{res_conv_layer.1} parent=11 // pred_check_branch
        %168 = sbr.rel (%p166) target = $region20
      $region19: #{res_conv_layer.1} parent=11 // pred_region
        _
      $region20: #{res_conv_layer.1} parent=11 // pred_fallthru
        _
    $region12: #{res_conv_layer.1} parent=5 // pred_fallthru
      _
    %p169 = scmp.lt.s32.totalorder %s10, 2
    // Predicated region
    $region21: #{res_conv_layer.1} parent=5 // pred_check
      %p170 = pneg %p169
    $region22: #{res_conv_layer.1} parent=5 // pred_check_branch
      %172 = sbr.rel (%p170) target = $region24
    $region23: #{res_conv_layer.1} parent=5 // pred_region
      // Predicated region
      $region25: #{res_conv_layer.1} parent=23 // pred_check
        %p173 = pneg %p44
      $region26: #{res_conv_layer.1} parent=23 // pred_check_branch
        %175 = sbr.rel (%p173) target = $region28
      $region27: #{res_conv_layer.1} parent=23 // pred_region
        %s176 = smul.u32 2, %s18
        %p177 = scmp.lt.s32.totalorder %s17, 1
        %s178 = scalar_select %p177, %s17, 1
        %p179 = scmp.lt.s32.totalorder %s176, 1
        %s180 = scalar_select %p179, %s176, 1
        %s181 = smul.addr %s178, 2
        %s182 = sadd.s32 %s180, %s181
        %s183 = smul.addr %s182, 4
        %s184 = scalar_lea.vmem %s0, %s183
        %s185 = smul.u32 2, %s18
      $region28: #{res_conv_layer.1} parent=23 // pred_fallthru
        _
      // Predicated region
      $region29: #{res_conv_layer.1} parent=23 // pred_check
        %p186 = pneg %p72
      $region30: #{res_conv_layer.1} parent=23 // pred_check_branch
        %188 = sbr.rel (%p186) target = $region32
      $region31: #{res_conv_layer.1} parent=23 // pred_region
        %p189 = scmp.lt.s32.totalorder %s17, 1
        %s190 = scalar_select %p189, %s17, 1
        %p191 = scmp.lt.s32.totalorder %s18, 0
        %s192 = scalar_select %p191, %s18, 0
        %s193 = sadd.s32 %s192, %s190
        %s194 = smul.addr %s193, 8
        %s195 = scalar_lea.vmem %s1, %s194
      $region32: #{res_conv_layer.1} parent=23 // pred_fallthru
        _
    $region24: #{res_conv_layer.1} parent=5 // pred_fallthru
      _
    %p196 = scmp.le.s32.totalorder 1, %s10
    %p197 = scmp.lt.s32.totalorder %s10, 3
    %p198 = pnand %p196, %p197
    %p199 = pneg %p198
    // Predicated region
    $region33: #{res_conv_layer.1} parent=5 // pred_check
      _
    $region34: #{res_conv_layer.1} parent=5 // pred_check_branch
      %201 = sbr.rel (%p198) target = $region36
    $region35: #{res_conv_layer.1} parent=5 // pred_region
      %s202 = ssub.s32 %s10, 1
      %s203 = smul.u32 2, %s20
      %p204 = scmp.lt.s32.totalorder %s19, 1
      %s205 = scalar_select %p204, %s19, 1
      %p206 = scmp.lt.s32.totalorder %s203, 1
      %s207 = scalar_select %p206, %s203, 1
      %s208 = smul.addr %s205, 2
      %s209 = sadd.s32 %s207, %s208
      %s210 = smul.addr %s209, 4
      %s211 = scalar_lea.vmem %s0, %s210
      %p212 = pneg %p50
      %p213 = pneg %p47
      %p214 = scmp.lt.s32.totalorder %s19, 1
      %s215 = scalar_select %p214, %s19, 1
      %p216 = scmp.lt.s32.totalorder %s20, 0
      %s217 = scalar_select %p216, %s20, 0
      %s218 = sadd.s32 %s217, %s215
      %s219 = smul.addr %s218, 8
      %s220 = scalar_lea.vmem %s1, %s219
      %p221 = pneg %p78
      %p222 = pneg %p75
      %p223 = pneg %p99
      %p224 = pneg %p96
      %p225 = pneg %p120
      %p226 = pneg %p117
      %p227 = pneg %p148
      %p228 = pneg %p145
      %s229 = smul.u32 2, %s20
      %p230 = scmp.lt.s32.totalorder %s19, 1
      %s231 = scalar_select %p230, %s19, 1
      %p232 = scmp.lt.s32.totalorder %s229, 1
      %s233 = scalar_select %p232, %s229, 1
      %s234 = smul.addr %s231, 8
      %s235 = sadd.s32 %s233, %s234
      %s236 = smul.addr %s235, 8
      %s237 = scalar_lea.vmem %s4, %s236
      %s238 = smul.u32 2, %s20
      %p239 = scmp.lt.s32.totalorder %s19, 1
      %s240 = scalar_select %p239, %s19, 1
      %p241 = scmp.lt.s32.totalorder %s238, 1
      %s242 = scalar_select %p241, %s238, 1
      %s243 = smul.addr %s240, 2
      %s244 = sadd.s32 %s242, %s243
      %s245 = smul.addr %s244, 4
      %s246 = scalar_lea.vmem %s0, %s245
      %s247 = smul.u32 2, %s20
      %p248 = scmp.lt.s32.totalorder %s19, 1
      %s249 = scalar_select %p248, %s19, 1
      %p250 = scmp.lt.s32.totalorder %s20, 0
      %s251 = scalar_select %p250, %s20, 0
      %s252 = sadd.s32 %s251, %s249
      %s253 = smul.addr %s252, 8
      %s254 = scalar_lea.vmem %s1, %s253
      %s255 = smul.u32 2, %s20
      %p256 = scmp.lt.s32.totalorder %s19, 1
      %s257 = scalar_select %p256, %s19, 1
      %p258 = scmp.lt.s32.totalorder %s255, 1
      %s259 = scalar_select %p258, %s255, 1
      %s260 = smul.addr %s257, 8
      %s261 = sadd.s32 %s259, %s260
      %s262 = smul.addr %s261, 8
      %s263 = scalar_lea.vmem %s4, %s262
      %s264 = smul.u32 2, %s20
      %v265 = vld [vmem:[%s246] sm:$0xff]
      %v266 = vld [vmem:[%s254] sm:$0xff]
      %v267 = vlaneseq
      %v268 = vand.u32 %v267, 127
      %269 = vrot.lane.b32.xlu0 %v268, 16
      %v270 = vpop.permute.xlu0 %269
      %vm271 = vcmask 130048
      %v272 = vsel %vm271, %v268, %v270
      %273 = vrot.lane.b32.xlu0 %v272, 32
      %v274 = vpop.permute.xlu0 %273
      %vm275 = vcmask 261120
      %v276 = vsel %vm275, %v272, %v274
      %277 = vrot.lane.b32.xlu0 %v276, 64
      %v278 = vpop.permute.xlu0 %277
      %vm279 = vcmask 523264
      %v280 = vsel %vm279, %v276, %v278
      %vm281 = vcmp.eq.s32.totalorder %v280, 0
      %vm282 = vcmp.eq.s32.totalorder %v280, 15
      %v284 = vcombine.high %v265, %v265
      %285 = vrot.lane.b32.xlu0 %v265, 1
      %v286 = vpop.permute.xlu0 %285
      %287 = vrot.lane.b32.xlu0 %v284, 1
      %v288 = vpop.permute.xlu0 %287
      %vm289 = vcmask 7168
      %v290 = vsel %vm289, %v286, %v288
      %v293 = vsel %vm289, %v265, %v286
      %294 = vrot.lane.b32.xlu0 %v265, 127
      %v295 = vpop.permute.xlu0 %294
      %296 = vrot.lane.b32.xlu0 %v284, 127
      %v297 = vpop.permute.xlu0 %296
      %vm298 = vcmask 1039360
      %v299 = vsel %vm298, %v295, %v297
      %v303 = vsel %vm298, %v297, %v284
      %v304 = vsel %vm281, 1, 0
      %v305 = vlaneseq
      %v306 = vshrl.u32 %v305, 7
      %v307 = vsub.s32 0, %v306
      %v308 = vrot.slane %v304, %v307
      %vm309 = vcmp.eq.s32.totalorder %v308, 1
      %v310 = vsel %vm309, %v299, %v293
      %v311 = vsel %vm309, %v303, %v290
      %v312 = vsel %vm282, 1, 0
      %v313 = vlaneseq
      %v314 = vshrl.u32 %v313, 7
      %v315 = vsub.s32 0, %v314
      %v316 = vrot.slane %v312, %v315
      %vm317 = vcmp.eq.s32.totalorder %v316, 1
      %v318 = vsel %vm317, %v293, %v299
      %v319 = vsel %vm317, %v290, %v303
      %321 = vrot.lane.b32.xlu0 %v266, 127
      %v322 = vpop.permute.xlu0 %321
      %324 = vrot.lane.b32.xlu0 %v266, 1
      %v325 = vpop.permute.xlu0 %324
      %v327 = vsel %vm289, %v322, %v325
      %vm328 = vcmask 121856
      %v329 = vsel %vm328, %v322, %v325
      %vm330 = vcmask 125952
      %331 = vst.msk [vmem:[#allocation2] sm:$0xf] %vm330, %v327
      %334 = vrot.lane.b32.xlu0 %v310, 16
      %v335 = vpop.permute.xlu0 %334
      %336 = vrot.lane.b32.xlu0 %v311, 16
      %v337 = vpop.permute.xlu0 %336
      %v338 = vsel %vm271, %v335, %v337
      %vm341 = vcmask 1043584
      %342 = vst.msk [vmem:[#allocation2] sm:$0xf] %vm341, %v335
      %343 = vst [vmem:[#allocation2 + $0x8] sm:$0xf] %v338
      %v344 = vrot.slane %v266, 4
      %vm346 = vcmask 130052
      %347 = vst.msk [vmem:[#allocation2] sm:$0xf0] %vm346, %v344
      %v348 = vcombine.low %v265, %v265
      %349 = vrot.lane.b32.xlu0 %v348, 16
      %v350 = vpop.permute.xlu0 %349
      %351 = vrot.lane.b32.xlu0 %v265, 16
      %v352 = vpop.permute.xlu0 %351
      %v353 = vsel %vm271, %v350, %v352
      %vm356 = vcmask 1047684
      %357 = vst.msk [vmem:[#allocation2] sm:$0xf0] %vm356, %v350
      %358 = vst [vmem:[#allocation2 + $0x8] sm:$0xf0] %v353
      %359 = vst.msk [vmem:[#allocation2 + $0x10] sm:$0xf] %vm330, %v329
      %362 = vrot.lane.b32.xlu0 %v318, 16
      %v363 = vpop.permute.xlu0 %362
      %364 = vrot.lane.b32.xlu0 %v319, 16
      %v365 = vpop.permute.xlu0 %364
      %v366 = vsel %vm271, %v363, %v365
      %369 = vst.msk [vmem:[#allocation2 + $0x10] sm:$0xf] %vm341, %v363
      %370 = vst [vmem:[#allocation2 + $0x18] sm:$0xf] %v366
      %v371 = vrot.slane %v310, 4
      %v372 = vrot.slane %v311, 4
      %375 = vst [vmem:[#allocation2 + $0x10] sm:$0xf0] %v371
      %376 = vst [vmem:[#allocation2 + $0x18] sm:$0xf0] %v372
      %377 = vst [vmem:[#allocation2 + $0x20] sm:$0xf] %v265
      %378 = vst [vmem:[#allocation2 + $0x28] sm:$0xf] %v284
      %v379 = vrot.slane %v318, 4
      %v380 = vrot.slane %v319, 4
      %383 = vst [vmem:[#allocation2 + $0x20] sm:$0xf0] %v379
      %384 = vst [vmem:[#allocation2 + $0x28] sm:$0xf0] %v380
      %385 = vrot.lane.b32.xlu0 %v310, 112
      %v386 = vpop.permute.xlu0 %385
      %387 = vrot.lane.b32.xlu0 %v311, 112
      %v388 = vpop.permute.xlu0 %387
      %vm389 = vcmask 916480
      %v390 = vsel %vm389, %v386, %v388
      %393 = vst [vmem:[#allocation2 + $0x30] sm:$0xf] %v390
      %vm394 = vcmask 912384
      %395 = vst.msk [vmem:[#allocation2 + $0x38] sm:$0xf] %vm394, %v388
      %v397 = vrot.slane %v327, 4
      %398 = vrot.lane.b32.xlu0 %v397, 112
      %v399 = vpop.permute.xlu0 %398
      %vm401 = vcmask 1044352
      %402 = vst.msk [vmem:[#allocation2 + $0x38] sm:$0xf] %vm401, %v399
      %403 = vrot.lane.b32.xlu0 %v348, 112
      %v404 = vpop.permute.xlu0 %403
      %405 = vrot.lane.b32.xlu0 %v265, 112
      %v406 = vpop.permute.xlu0 %405
      %v407 = vsel %vm389, %v404, %v406
      %410 = vst [vmem:[#allocation2 + $0x30] sm:$0xf0] %v407
      %vm411 = vcmask 916484
      %412 = vst.msk [vmem:[#allocation2 + $0x38] sm:$0xf0] %vm411, %v406
      %413 = vrot.lane.b32.xlu0 %v266, 112
      %v414 = vpop.permute.xlu0 %413
      %vm416 = vcmask 1048452
      %417 = vst.msk [vmem:[#allocation2 + $0x38] sm:$0xf0] %vm416, %v414
      %418 = vrot.lane.b32.xlu0 %v318, 112
      %v419 = vpop.permute.xlu0 %418
      %420 = vrot.lane.b32.xlu0 %v319, 112
      %v421 = vpop.permute.xlu0 %420
      %v422 = vsel %vm389, %v419, %v421
      %425 = vst [vmem:[#allocation2 + $0x40] sm:$0xf] %v422
      %426 = vst.msk [vmem:[#allocation2 + $0x48] sm:$0xf] %vm394, %v421
      %v428 = vrot.slane %v329, 4
      %429 = vrot.lane.b32.xlu0 %v428, 112
      %v430 = vpop.permute.xlu0 %429
      %432 = vst.msk [vmem:[#allocation2 + $0x48] sm:$0xf] %vm401, %v430
      %v433 = vld [vmem:[%s2] sm:$0xff]
      %v434 = vld [vmem:[%s2 + $0x8] sm:$0xff]
      %v435 = vld [vmem:[%s2 + $0x10] sm:$0xff]
      %v436 = vld [vmem:[%s2 + $0x18] sm:$0xff]
      %v437 = vld [vmem:[#allocation2] sm:$0xff]
      %v438 = vld [vmem:[#allocation2 + $0x8] sm:$0xff]
      %v439 = vld [vmem:[#allocation2 + $0x10] sm:$0xff]
      %v440 = vld [vmem:[#allocation2 + $0x18] sm:$0xff]
      %v441 = vld [vmem:[#allocation2 + $0x20] sm:$0xff]
      %v442 = vld [vmem:[#allocation2 + $0x28] sm:$0xff]
      %v443 = vld [vmem:[#allocation2 + $0x30] sm:$0xff]
      %v444 = vld [vmem:[#allocation2 + $0x38] sm:$0xff]
      %v445 = vld [vmem:[#allocation2 + $0x40] sm:$0xf]
      %v446 = vld [vmem:[#allocation2 + $0x48] sm:$0xf]
      %v447 = vld [vmem:[%s3] sm:$0xff]
      %v448 = vld [vmem:[%s3 + $0x8] sm:$0xff]
      %v449 = vld [vmem:[%s3 + $0x10] sm:$0xff]
      %v450 = vld [vmem:[%s3 + $0x18] sm:$0xff]
      %452 = vset.pattern.permute.xlu0 0
      %453 = vperm.xlu0 %452, %v447
      %v454 = vpop.permute.xlu0 %453
      %457 = vset.pattern.permute.xlu0 0
      %458 = vperm.xlu0 %457, %v448
      %v459 = vpop.permute.xlu0 %458
      %462 = vset.pattern.permute.xlu0 0
      %463 = vperm.xlu0 %462, %v449
      %v464 = vpop.permute.xlu0 %463
      %467 = vset.pattern.permute.xlu0 0
      %468 = vperm.xlu0 %467, %v450
      %v469 = vpop.permute.xlu0 %468
      %vm471 = vcmask 293888
      %v473 = vsel %vm471, %v433, 0
      %v476 = vsel %vm471, %v434, 0
      %v479 = vsel %vm471, %v435, 0
      %v482 = vsel %vm471, %v436, 0
      %vm484 = vcmask 1043456
      %v486 = vsel %vm484, %v445, 0
      %v489 = vsel %vm484, %v446, 0
      %491 = vmatprep.subr.mxu0 %v438
      %492 = vmatpush1.msra.mxu0 %v437
      %493 = vmatprep.subr.mxu0 %v440
      %494 = vmatpush1.msra.mxu0 %v439
      %495 = vmatprep.subr.mxu0 %v442
      %496 = vmatpush1.msra.mxu0 %v441
      %497 = vmatprep.subr.mxu0 %v444
      %498 = vmatpush1.msra.mxu0 %v443
      %499 = vmatprep.subr.mxu0 %v489
      %500 = vmatpush1.msra.mxu0 %v486
      %501 = vmatprep.subr.mxu0 0.0
      %502 = vmatpush1.msra.mxu0 0.0
      %503 = vmatprep.subr.mxu0 0.0
      %504 = vmatpush1.msra.mxu0 0.0
      %505 = vmatprep.subr.mxu0 0.0
      %506 = vmatpush1.msra.mxu0 0.0
      %507 = vmatprep.subr.mxu0 0.0
      %508 = vmatpush1.msra.mxu0 0.0
      %509 = vmatprep.subr.mxu0 0.0
      %510 = vmatpush1.msra.mxu0 0.0
      %511 = vmatprep.subr.mxu0 0.0
      %512 = vmatpush1.msra.mxu0 0.0
      %513 = vmatprep.subr.mxu0 0.0
      %514 = vmatpush1.msra.mxu0 0.0
      %515 = vmatprep.subr.mxu0 0.0
      %516 = vmatpush1.msra.mxu0 0.0
      %517 = vmatprep.subr.mxu0 0.0
      %518 = vmatpush1.msra.mxu0 0.0
      %519 = vmatprep.subr.mxu0 0.0
      %520 = vmatpush1.msra.mxu0 0.0
      %521 = vmatprep.subr.mxu0 0.0
      %522 = vmatpush1.msra.mxu0 0.0
      %523 = vmatprep.subr.mxu0 0.0
      %524 = vmatpush1.msra.mxu0 0.0
      %525 = vmatprep.subr.mxu0 0.0
      %526 = vmatpush1.msra.mxu0 0.0
      %527 = vmatprep.subr.mxu0 0.0
      %528 = vmatpush1.msra.mxu0 0.0
      %529 = vmatprep.subr.mxu0 0.0
      %530 = vmatpush1.msra.mxu0 0.0
      %531 = vmatprep.subr.mxu0 0.0
      %532 = vmatpush1.msra.mxu0 0.0
      %533 = vmatprep.subr.mxu0 0.0
      %534 = vmatpush1.msra.mxu0 0.0
      %535 = vmatprep.subr.mxu0 0.0
      %536 = vmatpush1.msra.mxu0 0.0
      %537 = vmatprep.subr.mxu0 0.0
      %538 = vmatpush1.msra.mxu0 0.0
      %539 = vmatprep.subr.mxu0 0.0
      %540 = vmatpush1.msra.mxu0 0.0
      %541 = vmatprep.subr.mxu0 0.0
      %542 = vmatpush1.msra.mxu0 0.0
      %543 = vmatprep.subr.mxu0 0.0
      %544 = vmatpush1.msra.mxu0 0.0
      %545 = vmatprep.subr.mxu0 0.0
      %546 = vmatpush1.msra.mxu0 0.0
      %547 = vmatprep.subr.mxu0 0.0
      %548 = vmatpush1.msra.mxu0 0.0
      %549 = vmatprep.subr.mxu0 0.0
      %550 = vmatpush1.msra.mxu0 0.0
      %551 = vmatprep.subr.mxu0 0.0
      %552 = vmatpush1.msra.mxu0 0.0
      %553 = vmatprep.subr.mxu0 0.0
      %554 = vmatpush1.msra.mxu0 0.0
      %555 = vmatprep.mubr.f32.mxu0 0.0
      %556 = vmatmul.mubr.f32.gmra.mrb[0].mxu0 %v473
      %v557 = vpop.f32.mrb[0].mxu0
      %v558 = vadd.f32 %v454, %v557
      %v559 = vpop.f32.mrb[0].mxu0
      %v560 = vadd.f32 %v454, %v559
      %561 = vmatprep.mubr.f32.mxu0 0.0
      %562 = vmatmul.mubr.f32.gmra.mrb[0].mxu0 %v476
      %v563 = vpop.f32.mrb[0].mxu0
      %v564 = vadd.f32 %v459, %v563
      %v565 = vpop.f32.mrb[0].mxu0
      %v566 = vadd.f32 %v459, %v565
      %567 = vmatprep.mubr.f32.mxu0 0.0
      %568 = vmatmul.mubr.f32.gmra.mrb[0].mxu0 %v479
      %v569 = vpop.f32.mrb[0].mxu0
      %v570 = vadd.f32 %v464, %v569
      %v571 = vpop.f32.mrb[0].mxu0
      %v572 = vadd.f32 %v464, %v571
      %573 = vmatprep.mubr.f32.mxu0 0.0
      %574 = vmatmul.mubr.f32.gmra.mrb[0].mxu0 %v482
      %v575 = vpop.f32.mrb[0].mxu0
      %v576 = vadd.f32 %v469, %v575
      %v577 = vpop.f32.mrb[0].mxu0
      %v578 = vadd.f32 %v469, %v577
      %579 = vdwg.mxu0
      %v580 = vmax.f32 %v558, 0.0
      %v581 = vmax.f32 %v560, 0.0
      %v582 = vmax.f32 %v564, 0.0
      %v583 = vmax.f32 %v566, 0.0
      %v584 = vmax.f32 %v570, 0.0
      %v585 = vmax.f32 %v572, 0.0
      %v586 = vmax.f32 %v576, 0.0
      %v587 = vmax.f32 %v578, 0.0
      %588 = vst [vmem:[%s263] sm:$0xff] %v580
      %589 = vst [vmem:[%s263 + $0x8] sm:$0xff] %v581
      %590 = vst [vmem:[%s263 + $0x10] sm:$0xff] %v582
      %591 = vst [vmem:[%s263 + $0x18] sm:$0xff] %v583
      %592 = vst [vmem:[%s263 + $0x20] sm:$0xff] %v584
      %593 = vst [vmem:[%s263 + $0x28] sm:$0xff] %v585
      %594 = vst [vmem:[%s263 + $0x30] sm:$0x7f] %v586
      %595 = vst [vmem:[%s263 + $0x38] sm:$0x7f] %v587
      %v596 = vtanh.pop %v576
      %v597 = vtanh.pop %v578
      %v598 = vmul.f32 %v596, 0.125
      %v599 = vmul.f32 %v597, 0.125
      %v600 = vlaneseq
      %v601 = vshrl.u32 %v600, 7
      %v602 = vsub.s32 3, %v601
      %v603 = vrot.slane %v265, %v602
      %v604 = vlaneseq
      %v605 = vshrl.u32 %v604, 7
      %v606 = vsub.s32 7, %v605
      %v607 = vrot.slane %v265, %v606
      %v610 = vadd.f32 %v598, %v603
      %v611 = vadd.f32 %v599, %v607
      %v614 = vcombine.high %v610, %v611
      %v616 = vunpack.c.l.s4 1966171168
      %v617 = vunpack.c.0.s8 %v616
      %v618 = vlaneseq
      %v619 = vshrl.u32 %v618, 7
      %v620 = vsub.s32 %v617, %v619
      %v621 = vrot.slane %v614, %v620
      %v622 = vcombine.high %v621, %v621
      %v624 = vunpack.c.l.s4 1966171168
      %v625 = vunpack.c.0.s8 %v624
      %v626 = vlaneseq
      %v627 = vshrl.u32 %v626, 7
      %v628 = vsub.s32 %v625, %v627
      %v629 = vrot.slane %v622, %v628
      %v630 = vcombine.high %v629, %v629
      %v632 = vlaneseq
      %vm633 = vcmp.ge.s32.totalorder %v632, 0
      %vm634 = vcmp.lt.s32.totalorder %v632, 256
      %vm635 = vmand %vm633, %vm634
      %s636 = scalar_lea.vmem %s263, 55
      %637 = vst.msk [vmem:[%s636] ss:$8 sm:$0x3] %vm635, %v630
      %638 = vst.msk [vmem:[%s636] ss:$8 sm:$0x0] %vm635, %v630
      %s639 = smul.u32 2, %s20
      %p640 = scmp.lt.s32.totalorder %s19, 1
      %s641 = scalar_select %p640, %s19, 1
      %p642 = scmp.lt.s32.totalorder %s639, 1
      %s643 = scalar_select %p642, %s639, 1
      %s644 = smul.addr %s641, 8
      %s645 = sadd.s32 %s643, %s644
      %s646 = smul.addr %s645, 8
      %s647 = scalar_lea.vmem %s4, %s646
      // Predicated region
      $region37: #{res_conv_layer.1} parent=35 // pred_check
        %p648 = pneg %p145
      $region38: #{res_conv_layer.1} parent=35 // pred_check_branch
        %650 = sbr.rel (%p648) target = $region40
      $region39: #{res_conv_layer.1} parent=35 // pred_region
        %s651 = smul.u32 2, %s20
      $region40: #{res_conv_layer.1} parent=35 // pred_fallthru
        _
    $region36: #{res_conv_layer.1} parent=5 // pred_fallthru
      _
    %p652 = scmp.le.s32.totalorder 2, %s10
    // Predicated region
    $region41: #{res_conv_layer.1} parent=5 // pred_check
      %p653 = pneg %p652
    $region42: #{res_conv_layer.1} parent=5 // pred_check_branch
      %655 = sbr.rel (%p653) target = $region44
    $region43: #{res_conv_layer.1} parent=5 // pred_region
      %s656 = ssub.s32 %s10, 2
      // Predicated region
      $region45: #{res_conv_layer.1} parent=43 // pred_check
        %p657 = pneg %p151
      $region46: #{res_conv_layer.1} parent=43 // pred_check_branch
        %659 = sbr.rel (%p657) target = $region48
      $region47: #{res_conv_layer.1} parent=43 // pred_region
        %s660 = smul.u32 2, %s22
        %p661 = scmp.lt.s32.totalorder %s21, 1
        %s662 = scalar_select %p661, %s21, 1
        %p663 = scmp.lt.s32.totalorder %s660, 1
        %s664 = scalar_select %p663, %s660, 1
        %s665 = smul.addr %s662, 8
        %s666 = sadd.s32 %s664, %s665
        %s667 = smul.addr %s666, 8
        %s668 = scalar_lea.vmem %s4, %s667
      $region48: #{res_conv_layer.1} parent=43 // pred_fallthru
        _
    $region44: #{res_conv_layer.1} parent=5 // pred_fallthru
      _
  $region6: #{res_conv_layer.1} parent=0 // loop_footer
    %s14 = sadd.s32 1, %s10
  $region7: #{res_conv_layer.1} parent=0 // loop_footer_branch
    %9 = sbr.rel target = $region3
  $region8: #{res_conv_layer.1} parent=0 // loop_exit
    _

</llo_original>
